<compile_context>
chip_gen: v5e
topology: v5e:2x2
jax: 0.10.0
libtpu: 0.0.40
codegen_flags: <defaults>
</compile_context>

<pallas_src>
import functools

import jax
import jax.numpy as jnp
from jax.experimental import pallas as pl
from jax.experimental.pallas import tpu as pltpu


def _qnetwork_kernel(w_ref, t14_ref, t5t_ref, feat_ref, adj_ref, emb0_ref,
                     ed_out_ref, q_out_ref,
                     *, p, nf_dim, update_iterations, use_bf16):
    def mm(a, b):
        if use_bf16:
            a = a.astype(jnp.bfloat16)
            b = b.astype(jnp.bfloat16)
        return jnp.dot(a, b, preferred_element_type=jnp.float32)

    # --- unpack the packed operands (static slices: zero-cost views) -------
    t2 = w_ref[0 * p:1 * p, :]          # [p, p]
    t3 = w_ref[1 * p:2 * p, :]          # [p, p]
    t6 = w_ref[2 * p:3 * p, :]          # [p, p]
    t7 = w_ref[3 * p:4 * p, :]          # [p, p]

    t14 = t14_ref[...]                  # [p, nf+ef]
    t1 = t14[:, :nf_dim]                # [p, nf]
    t4 = t14[:, nf_dim:]                # [p, ef]

    feat = feat_ref[...]                # [nf+ef, n]
    nf = feat[:nf_dim, :]               # [nf, n]
    edge_sum_t = feat[nf_dim:, :]       # [ef, n]  (precomputed neighbor sum)

    t5t = t5t_ref[...]                  # [2, 2p]  (theta5 pre-transposed)
    t5a_t = t5t[:, :p]                  # [2, p]
    t5b_t = t5t[:, p:]                  # [2, p]

    adj = adj_ref[...]                  # [n, n]
    emb0 = emb0_ref[...]                # [p, n]

    # --- loop-invariant term1 + term3 (K==1 -> VPU broadcast mul, f32) -----
    term1 = t1 * nf if t1.shape[1] == 1 else mm(t1, nf)
    pre3 = t4 * edge_sum_t if t4.shape[1] == 1 else mm(t4, edge_sum_t)
    term3 = mm(t3, pre3)                                        # [p, n]
    base = term1 + term3

    # --- message passing, fully unrolled (update_iterations is static) -----
    emb = emb0
    prev = emb0
    for _ in range(update_iterations):
        prev = emb
        emb = base + mm(t2, mm(emb, adj))
    delta = prev - emb if update_iterations > 0 else jnp.zeros_like(emb)

    # Fused output slab: rows [:p] = embedding, rows [p:] = delta.
    ed_out_ref[0:p, :] = emb
    ed_out_ref[p:2 * p, :] = delta

    # --- Q head -------------------------------------------------------------
    # state = emb.sum(-1); theta6 @ broadcast(state) == broadcast(theta6@state)
    state = jnp.sum(emb, axis=-1, keepdims=True)                # [p, 1]
    g = jnp.maximum(mm(t6, state), 0.0)                         # [p, 1]
    qa = mm(t5a_t, g)                                           # [2, 1]
    # relu / theta5 contraction commute with column selection, so the full
    # [2, n] map is produced here and the unassigned columns are sliced
    # outside the kernel (no one-hot gather matmul needed).
    b = jnp.maximum(mm(t7, emb), 0.0)                           # [p, n]
    qb = mm(t5b_t, b)                                           # [2, n]
    q_out_ref[...] = qa + qb                                    # broadcast add


def qnetwork_forward(params, node_features, adjacency, edge_features,
                     current_embedding, unassigned_indices,
                     update_iterations=4, use_bf16_matmul=True):
    p = current_embedding.shape[0]
    nf_dim = node_features.shape[0]
    ef_dim = edge_features.shape[2]
    n = adjacency.shape[0]

    idx = tuple(int(i) for i in unassigned_indices)

    # Loop-invariant edge reduction done once outside the kernel so the
    # O(n^2 * ef) edge tensor is never DMA'd into VMEM.
    edge_sum_t = jnp.transpose(edge_features.sum(axis=1))           # [ef, n]

    # Operand packing (6 kernel inputs instead of 12).
    w_slab = jnp.concatenate([params['theta2'], params['theta3'],
                              params['theta6'], params['theta7']], axis=0)  # [4p, p]
    t14 = jnp.concatenate([params['theta1'], params['theta4']], axis=1)     # [p, nf+ef]
    t5_t = jnp.transpose(params['theta5'])                                  # [2, 2p]
    feat = jnp.concatenate([node_features, edge_sum_t], axis=0)             # [nf+ef, n]

    def full(shape):
        zeros = (0,) * len(shape)
        return pl.BlockSpec(shape, lambda i, z=zeros: z)

    kernel = functools.partial(_qnetwork_kernel,
                               p=int(p), nf_dim=int(nf_dim),
                               update_iterations=int(update_iterations),
                               use_bf16=bool(use_bf16_matmul))

    ed, q_full = pl.pallas_call(
        kernel,
        grid=(1,),
        in_specs=[full((4 * p, p)),
                  full((p, nf_dim + ef_dim)),
                  full((2, 2 * p)),
                  full((nf_dim + ef_dim, n)),
                  full((n, n)),
                  full((p, n))],
        out_specs=(full((2 * p, n)), full((2, n))),
        out_shape=(jax.ShapeDtypeStruct((2 * p, n), jnp.float32),
                   jax.ShapeDtypeStruct((2, n), jnp.float32)),
        compiler_params=pltpu.CompilerParams(
            dimension_semantics=("arbitrary",)),
    )(w_slab, t14, t5_t, feat, adjacency, current_embedding)

    emb = ed[:p]
    delta = ed[p:]
    # Static column selection of the unassigned variables (cheap XLA slice).
    q_values = jnp.take(q_full, jnp.asarray(idx, dtype=jnp.int32), axis=1)
    return emb, q_values, delta


def _reference_forward(params, nf, adj, edge, emb, unassigned, T):
    """Plain-JAX reference mirroring the PyTorch forward, for verification."""
    term1 = params['theta1'] @ nf
    edge_sum = edge.sum(axis=1)
    term3 = params['theta3'] @ (params['theta4'] @ edge_sum.T)
    delta = jnp.zeros_like(emb)
    for _ in range(T):
        tmp = emb
        emb = term1 + params['theta2'] @ (emb @ adj) + term3
        delta = tmp - emb
    state = emb.sum(-1, keepdims=True)
    emb_u = emb[:, jnp.asarray(unassigned)]
    a_ = params['theta6'] @ jnp.broadcast_to(state, (state.shape[0], emb_u.shape[1]))
    b_ = params['theta7'] @ emb_u
    q = params['theta5'].T @ jnp.maximum(jnp.concatenate([a_, b_], 0), 0.0)
    return emb, q, delta


if __name__ == "__main__":
    # Small, self-consistent shapes (embedding_dimension=32 instead of 100).
    P = 32          # embedding dimension
    T = 4           # update iterations
    NF = 1          # node feature dimension
    EF = 1          # edge feature dimension
    N = 16          # number of nodes

    key = jax.random.PRNGKey(0)
    keys = jax.random.split(key, 12)
    std = 0.0095

    params = {
        'theta1': std * jax.random.normal(keys[0], (P, NF), jnp.float32),
        'theta2': std * jax.random.normal(keys[1], (P, P), jnp.float32),
        'theta3': std * jax.random.normal(keys[2], (P, P), jnp.float32),
        'theta4': std * jax.random.normal(keys[3], (P, EF), jnp.float32),
        'theta5': std * jax.random.normal(keys[4], (2 * P, 2), jnp.float32),
        'theta6': std * jax.random.normal(keys[5], (P, P), jnp.float32),
        'theta7': std * jax.random.normal(keys[6], (P, P), jnp.float32),
    }

    node_features = jax.random.normal(keys[7], (NF, N), jnp.float32)
    adj_raw = (jax.random.uniform(keys[8], (N, N)) > 0.5).astype(jnp.float32)
    adjacency = jnp.maximum(adj_raw, adj_raw.T)          # symmetric
    adjacency = adjacency * (1.0 - jnp.eye(N, dtype=jnp.float32))
    edge_raw = jax.random.normal(keys[9], (N, N, EF), jnp.float32)
    edge_features = 0.5 * (edge_raw + jnp.transpose(edge_raw, (1, 0, 2)))
    current_embedding = jax.random.normal(keys[10], (P, N), jnp.float32)

    unassigned = (0, 2, 5, 7, 9, 11, 13, 15)   # static (compile-time) indices

    fwd = jax.jit(qnetwork_forward,
                  static_argnames=("unassigned_indices", "update_iterations",
                                   "use_bf16_matmul"))

    # Plain-JAX reference.
    emb_r, q_r, d_r = _reference_forward(
        params, node_features, adjacency, edge_features,
        current_embedding, unassigned, T)

    # 1) f32 MXU path: exact-ish, tight tolerance check.
    emb32, q32, d32 = fwd(params, node_features, adjacency, edge_features,
                          current_embedding,
                          unassigned_indices=unassigned,
                          update_iterations=T,
                          use_bf16_matmul=False)
    jax.block_until_ready((emb32, q32, d32))
    assert emb32.shape == (P, N)
    assert q32.shape == (2, len(unassigned))
    assert d32.shape == (P, N)
    assert jnp.allclose(emb32, emb_r, rtol=1e-3, atol=1e-5)
    assert jnp.allclose(q32, q_r, rtol=1e-3, atol=1e-5)
    assert jnp.allclose(d32, d_r, rtol=1e-3, atol=1e-5)

    # 2) Default bf16 MXU path (f32 accumulation): rounding compounds over the
    #    T-iteration recurrence, so validate at a looser tolerance.
    emb, q_values, delta = fwd(params, node_features, adjacency, edge_features,
                               current_embedding,
                               unassigned_indices=unassigned,
                               update_iterations=T)
    jax.block_until_ready((emb, q_values, delta))
    assert emb.shape == (P, N)
    assert q_values.shape == (2, len(unassigned))
    assert delta.shape == (P, N)
    assert jnp.allclose(emb, emb_r, rtol=5e-2, atol=1e-3)
    assert jnp.allclose(q_values, q_r, rtol=5e-2, atol=1e-3)
    assert jnp.allclose(delta, d_r, rtol=5e-2, atol=1e-3)

    print("KERNEL_OK")
</pallas_src>

<mosaic_0001>
module attributes {stable_mosaic.version = 11 : i64} {
  func.func @_qnetwork_kernel(%arg0: i32, %arg1: memref<128x32xf32, #tpu.memory_space<vmem>>, %arg2: memref<32x2xf32, #tpu.memory_space<vmem>>, %arg3: memref<2x64xf32, #tpu.memory_space<vmem>>, %arg4: memref<2x16xf32, #tpu.memory_space<vmem>>, %arg5: memref<16x16xf32, #tpu.memory_space<vmem>>, %arg6: memref<32x16xf32, #tpu.memory_space<vmem>>, %arg7: memref<64x16xf32, #tpu.memory_space<vmem>>, %arg8: memref<2x16xf32, #tpu.memory_space<vmem>>) attributes {dimension_semantics = [#tpu.dimension_semantics<arbitrary>], iteration_bounds = array<i64: 1>, scalar_prefetch = 0 : i64, scratch_operands = 0 : i64, tpu.core_type = #tpu.core_type<tc>, window_params = [{pipeline_mode = #tpu.pipeline_mode<synchronous>, transform_indices = @transform_0, window_bounds = array<i64: 128, 32>}, {pipeline_mode = #tpu.pipeline_mode<synchronous>, transform_indices = @transform_1, window_bounds = array<i64: 32, 2>}, {pipeline_mode = #tpu.pipeline_mode<synchronous>, transform_indices = @transform_2, window_bounds = array<i64: 2, 64>}, {pipeline_mode = #tpu.pipeline_mode<synchronous>, transform_indices = @transform_3, window_bounds = array<i64: 2, 16>}, {pipeline_mode = #tpu.pipeline_mode<synchronous>, transform_indices = @transform_4, window_bounds = array<i64: 16, 16>}, {pipeline_mode = #tpu.pipeline_mode<synchronous>, transform_indices = @transform_5, window_bounds = array<i64: 32, 16>}, {pipeline_mode = #tpu.pipeline_mode<synchronous>, transform_indices = @transform_6, window_bounds = array<i64: 64, 16>}, {pipeline_mode = #tpu.pipeline_mode<synchronous>, transform_indices = @transform_7, window_bounds = array<i64: 2, 16>}]} {
    %c0 = arith.constant 0 : index
    %c0_0 = arith.constant 0 : index
    %0 = vector.load %arg1[%c0, %c0_0] : memref<128x32xf32, #tpu.memory_space<vmem>>, vector<32x32xf32>
    %c32 = arith.constant 32 : index
    %c0_1 = arith.constant 0 : index
    %1 = vector.load %arg1[%c32, %c0_1] : memref<128x32xf32, #tpu.memory_space<vmem>>, vector<32x32xf32>
    %c64 = arith.constant 64 : index
    %c0_2 = arith.constant 0 : index
    %2 = vector.load %arg1[%c64, %c0_2] : memref<128x32xf32, #tpu.memory_space<vmem>>, vector<32x32xf32>
    %c96 = arith.constant 96 : index
    %c0_3 = arith.constant 0 : index
    %3 = vector.load %arg1[%c96, %c0_3] : memref<128x32xf32, #tpu.memory_space<vmem>>, vector<32x32xf32>
    %c0_4 = arith.constant 0 : index
    %c0_5 = arith.constant 0 : index
    %4 = vector.load %arg2[%c0_4, %c0_5] : memref<32x2xf32, #tpu.memory_space<vmem>>, vector<32x2xf32>
    %5 = vector.extract_strided_slice %4 {offsets = [0, 0], sizes = [32, 1], strides = [1, 1]} : vector<32x2xf32> to vector<32x1xf32>
    %6 = vector.extract_strided_slice %4 {offsets = [0, 1], sizes = [32, 1], strides = [1, 1]} : vector<32x2xf32> to vector<32x1xf32>
    %c0_6 = arith.constant 0 : index
    %c0_7 = arith.constant 0 : index
    %7 = vector.load %arg4[%c0_6, %c0_7] : memref<2x16xf32, #tpu.memory_space<vmem>>, vector<2x16xf32>
    %8 = vector.extract_strided_slice %7 {offsets = [0, 0], sizes = [1, 16], strides = [1, 1]} : vector<2x16xf32> to vector<1x16xf32>
    %9 = vector.extract_strided_slice %7 {offsets = [1, 0], sizes = [1, 16], strides = [1, 1]} : vector<2x16xf32> to vector<1x16xf32>
    %c0_8 = arith.constant 0 : index
    %c0_9 = arith.constant 0 : index
    %10 = vector.load %arg3[%c0_8, %c0_9] : memref<2x64xf32, #tpu.memory_space<vmem>>, vector<2x64xf32>
    %11 = vector.extract_strided_slice %10 {offsets = [0, 0], sizes = [2, 32], strides = [1, 1]} : vector<2x64xf32> to vector<2x32xf32>
    %12 = vector.extract_strided_slice %10 {offsets = [0, 32], sizes = [2, 32], strides = [1, 1]} : vector<2x64xf32> to vector<2x32xf32>
    %c0_10 = arith.constant 0 : index
    %c0_11 = arith.constant 0 : index
    %13 = vector.load %arg5[%c0_10, %c0_11] : memref<16x16xf32, #tpu.memory_space<vmem>>, vector<16x16xf32>
    %c0_12 = arith.constant 0 : index
    %c0_13 = arith.constant 0 : index
    %14 = vector.load %arg6[%c0_12, %c0_13] : memref<32x16xf32, #tpu.memory_space<vmem>>, vector<32x16xf32>
    %15 = vector.broadcast %5 : vector<32x1xf32> to vector<32x16xf32>
    %16 = vector.broadcast %8 : vector<1x16xf32> to vector<32x16xf32>
    %17 = arith.mulf %15, %16 : vector<32x16xf32>
    %18 = vector.broadcast %6 : vector<32x1xf32> to vector<32x16xf32>
    %19 = vector.broadcast %9 : vector<1x16xf32> to vector<32x16xf32>
    %20 = arith.mulf %18, %19 : vector<32x16xf32>
    %cst = arith.constant dense<0.000000e+00> : vector<32x16xf32>
    %21 = tpu.matmul %1, %20, %cst {dimension_numbers = #tpu.dot_dimension_numbers<[1], [0], [0], [1], [0, 0, 1, 1], [], []>} : vector<32x32xf32>, vector<32x16xf32>, vector<32x16xf32> -> vector<32x16xf32>
    %22 = arith.addf %17, %21 : vector<32x16xf32>
    %cst_14 = arith.constant dense<0.000000e+00> : vector<32x16xf32>
    %23 = tpu.matmul %14, %13, %cst_14 {dimension_numbers = #tpu.dot_dimension_numbers<[1], [0], [0], [1], [0, 0, 1, 1], [], []>} : vector<32x16xf32>, vector<16x16xf32>, vector<32x16xf32> -> vector<32x16xf32>
    %cst_15 = arith.constant dense<0.000000e+00> : vector<32x16xf32>
    %24 = tpu.matmul %0, %23, %cst_15 {dimension_numbers = #tpu.dot_dimension_numbers<[1], [0], [0], [1], [0, 0, 1, 1], [], []>} : vector<32x32xf32>, vector<32x16xf32>, vector<32x16xf32> -> vector<32x16xf32>
    %25 = arith.addf %22, %24 : vector<32x16xf32>
    %cst_16 = arith.constant dense<0.000000e+00> : vector<32x16xf32>
    %26 = tpu.matmul %25, %13, %cst_16 {dimension_numbers = #tpu.dot_dimension_numbers<[1], [0], [0], [1], [0, 0, 1, 1], [], []>} : vector<32x16xf32>, vector<16x16xf32>, vector<32x16xf32> -> vector<32x16xf32>
    %cst_17 = arith.constant dense<0.000000e+00> : vector<32x16xf32>
    %27 = tpu.matmul %0, %26, %cst_17 {dimension_numbers = #tpu.dot_dimension_numbers<[1], [0], [0], [1], [0, 0, 1, 1], [], []>} : vector<32x32xf32>, vector<32x16xf32>, vector<32x16xf32> -> vector<32x16xf32>
    %28 = arith.addf %22, %27 : vector<32x16xf32>
    %cst_18 = arith.constant dense<0.000000e+00> : vector<32x16xf32>
    %29 = tpu.matmul %28, %13, %cst_18 {dimension_numbers = #tpu.dot_dimension_numbers<[1], [0], [0], [1], [0, 0, 1, 1], [], []>} : vector<32x16xf32>, vector<16x16xf32>, vector<32x16xf32> -> vector<32x16xf32>
    %cst_19 = arith.constant dense<0.000000e+00> : vector<32x16xf32>
    %30 = tpu.matmul %0, %29, %cst_19 {dimension_numbers = #tpu.dot_dimension_numbers<[1], [0], [0], [1], [0, 0, 1, 1], [], []>} : vector<32x32xf32>, vector<32x16xf32>, vector<32x16xf32> -> vector<32x16xf32>
    %31 = arith.addf %22, %30 : vector<32x16xf32>
    %cst_20 = arith.constant dense<0.000000e+00> : vector<32x16xf32>
    %32 = tpu.matmul %31, %13, %cst_20 {dimension_numbers = #tpu.dot_dimension_numbers<[1], [0], [0], [1], [0, 0, 1, 1], [], []>} : vector<32x16xf32>, vector<16x16xf32>, vector<32x16xf32> -> vector<32x16xf32>
    %cst_21 = arith.constant dense<0.000000e+00> : vector<32x16xf32>
    %33 = tpu.matmul %0, %32, %cst_21 {dimension_numbers = #tpu.dot_dimension_numbers<[1], [0], [0], [1], [0, 0, 1, 1], [], []>} : vector<32x32xf32>, vector<32x16xf32>, vector<32x16xf32> -> vector<32x16xf32>
    %34 = arith.addf %22, %33 : vector<32x16xf32>
    %35 = arith.subf %31, %34 : vector<32x16xf32>
    %c0_22 = arith.constant 0 : index
    %c0_23 = arith.constant 0 : index
    %36 = vector.load %arg7[%c0_22, %c0_23] : memref<64x16xf32, #tpu.memory_space<vmem>>, vector<32x16xf32>
    tpu.vector_store %arg7[%c0_22, %c0_23], %34 {strides = array<i32>} : memref<64x16xf32, #tpu.memory_space<vmem>>, vector<32x16xf32>,
    %c32_24 = arith.constant 32 : index
    %c0_25 = arith.constant 0 : index
    %37 = vector.load %arg7[%c32_24, %c0_25] : memref<64x16xf32, #tpu.memory_space<vmem>>, vector<32x16xf32>
    tpu.vector_store %arg7[%c32_24, %c0_25], %35 {strides = array<i32>} : memref<64x16xf32, #tpu.memory_space<vmem>>, vector<32x16xf32>,
    %cst_26 = arith.constant dense<0.000000e+00> : vector<32xf32>
    %38 = vector.multi_reduction <add>, %34, %cst_26 [1] : vector<32x16xf32> to vector<32xf32>
    %39 = vector.shape_cast %38 : vector<32xf32> to vector<32x1xf32>
    %cst_27 = arith.constant dense<0.000000e+00> : vector<32x1xf32>
    %40 = tpu.matmul %2, %39, %cst_27 {dimension_numbers = #tpu.dot_dimension_numbers<[1], [0], [0], [1], [0, 0, 1, 1], [], []>} : vector<32x32xf32>, vector<32x1xf32>, vector<32x1xf32> -> vector<32x1xf32>
    %cst_28 = arith.constant 0.000000e+00 : f32
    %41 = vector.broadcast %cst_28 : f32 to vector<32x1xf32>
    %42 = arith.maximumf %40, %41 : vector<32x1xf32>
    %cst_29 = arith.constant dense<0.000000e+00> : vector<2x1xf32>
    %43 = tpu.matmul %11, %42, %cst_29 {dimension_numbers = #tpu.dot_dimension_numbers<[1], [0], [0], [1], [0, 0, 1, 1], [], []>} : vector<2x32xf32>, vector<32x1xf32>, vector<2x1xf32> -> vector<2x1xf32>
    %cst_30 = arith.constant dense<0.000000e+00> : vector<32x16xf32>
    %44 = tpu.matmul %3, %34, %cst_30 {dimension_numbers = #tpu.dot_dimension_numbers<[1], [0], [0], [1], [0, 0, 1, 1], [], []>} : vector<32x32xf32>, vector<32x16xf32>, vector<32x16xf32> -> vector<32x16xf32>
    %cst_31 = arith.constant 0.000000e+00 : f32
    %45 = vector.broadcast %cst_31 : f32 to vector<32x16xf32>
    %46 = arith.maximumf %44, %45 : vector<32x16xf32>
    %cst_32 = arith.constant dense<0.000000e+00> : vector<2x16xf32>
    %47 = tpu.matmul %12, %46, %cst_32 {dimension_numbers = #tpu.dot_dimension_numbers<[1], [0], [0], [1], [0, 0, 1, 1], [], []>} : vector<2x32xf32>, vector<32x16xf32>, vector<2x16xf32> -> vector<2x16xf32>
    %48 = vector.broadcast %43 : vector<2x1xf32> to vector<2x16xf32>
    %49 = arith.addf %48, %47 : vector<2x16xf32>
    %c0_33 = arith.constant 0 : index
    %c0_34 = arith.constant 0 : index
    %50 = vector.load %arg8[%c0_33, %c0_34] : memref<2x16xf32, #tpu.memory_space<vmem>>, vector<2x16xf32>
    tpu.vector_store %arg8[%c0_33, %c0_34], %49 {strides = array<i32>} : memref<2x16xf32, #tpu.memory_space<vmem>>, vector<2x16xf32>,
    return
  }
  func.func @transform_0(%arg0: i32) -> (i32, i32) {
    %c0_i32 = arith.constant 0 : i32
    %c0_i32_0 = arith.constant 0 : i32
    %c0_i32_1 = arith.constant 0 : i32
    return %c0_i32, %c0_i32_0 : i32, i32
  }
  func.func @transform_1(%arg0: i32) -> (i32, i32) {
    %c0_i32 = arith.constant 0 : i32
    %c0_i32_0 = arith.constant 0 : i32
    %c0_i32_1 = arith.constant 0 : i32
    return %c0_i32, %c0_i32_0 : i32, i32
  }
  func.func @transform_2(%arg0: i32) -> (i32, i32) {
    %c0_i32 = arith.constant 0 : i32
    %c0_i32_0 = arith.constant 0 : i32
    %c0_i32_1 = arith.constant 0 : i32
    return %c0_i32, %c0_i32_0 : i32, i32
  }
  func.func @transform_3(%arg0: i32) -> (i32, i32) {
    %c0_i32 = arith.constant 0 : i32
    %c0_i32_0 = arith.constant 0 : i32
    %c0_i32_1 = arith.constant 0 : i32
    return %c0_i32, %c0_i32_0 : i32, i32
  }
  func.func @transform_4(%arg0: i32) -> (i32, i32) {
    %c0_i32 = arith.constant 0 : i32
    %c0_i32_0 = arith.constant 0 : i32
    %c0_i32_1 = arith.constant 0 : i32
    return %c0_i32, %c0_i32_0 : i32, i32
  }
  func.func @transform_5(%arg0: i32) -> (i32, i32) {
    %c0_i32 = arith.constant 0 : i32
    %c0_i32_0 = arith.constant 0 : i32
    %c0_i32_1 = arith.constant 0 : i32
    return %c0_i32, %c0_i32_0 : i32, i32
  }
  func.func @transform_6(%arg0: i32) -> (i32, i32) {
    %c0_i32 = arith.constant 0 : i32
    %c0_i32_0 = arith.constant 0 : i32
    %c0_i32_1 = arith.constant 0 : i32
    return %c0_i32, %c0_i32_0 : i32, i32
  }
  func.func @transform_7(%arg0: i32) -> (i32, i32) {
    %c0_i32 = arith.constant 0 : i32
    %c0_i32_0 = arith.constant 0 : i32
    %c0_i32_1 = arith.constant 0 : i32
    return %c0_i32, %c0_i32_0 : i32, i32
  }
}

</mosaic_0001>

<llo_original>
// kernel: qnetwork_forward.1
$region0: #{qnetwork_forward.1}
  #allocation0 [shape = 'u32[]', space=smem, size = 0x4, offset = 0x4, fixed_abs, tag = 'smem constant byte address 0x4 - core index']
  #allocation1 [shape = 'u32[72,128]{1,0:T(1,128)}', space=vmem, size = 0x9000, scoped, tag = 'internal scratch']
  %s0 = inlined_call_operand.vmem [shape: f32[128,32], index: 0, kind: input, shape index: {}]
  %s1 = inlined_call_operand.vmem [shape: f32[32,2], index: 1, kind: input, shape index: {}]
  %s2 = inlined_call_operand.vmem [shape: f32[2,64], index: 2, kind: input, shape index: {}]
  %s3 = inlined_call_operand.vmem [shape: f32[2,16], index: 3, kind: input, shape index: {}]
  %s4 = inlined_call_operand.vmem [shape: f32[16,16], index: 4, kind: input, shape index: {}]
  %s5 = inlined_call_operand.vmem [shape: f32[32,16], index: 5, kind: input, shape index: {}]
  %s6 = inlined_call_operand.vmem [shape: f32[64,16], index: 6, kind: output, shape index: {0}]
  %s7 = inlined_call_operand.vmem [shape: f32[2,16], index: 7, kind: output, shape index: {1}]
  %8 = xla_tuple %s6, %s7
  %s9 = sld [smem:[#allocation0]]
  $region42: #{qnetwork_forward.1} parent=0
    _
  %s11 = ssub.s32 1, %s9
  %s12 = scalar_select 0, %s11, %s9
  // Predicated region
  $region2: #{qnetwork_forward.1} parent=0 // pred_check
    _
  $region3: #{qnetwork_forward.1} parent=0 // pred_check_branch
    %14 = sbr.rel (0) target = $region5
  $region4: #{qnetwork_forward.1} parent=0 // pred_region
    _
  $region5: #{qnetwork_forward.1} parent=0 // pred_fallthru
    _
  // Predicated region
  $region6: #{qnetwork_forward.1} parent=0 // pred_check
    _
  $region7: #{qnetwork_forward.1} parent=0 // pred_check_branch
    %16 = sbr.rel (0) target = $region9
  $region8: #{qnetwork_forward.1} parent=0 // pred_region
    _
  $region9: #{qnetwork_forward.1} parent=0 // pred_fallthru
    _
  // Predicated region
  $region10: #{qnetwork_forward.1} parent=0 // pred_check
    _
  $region11: #{qnetwork_forward.1} parent=0 // pred_check_branch
    %18 = sbr.rel (0) target = $region13
  $region12: #{qnetwork_forward.1} parent=0 // pred_region
    _
  $region13: #{qnetwork_forward.1} parent=0 // pred_fallthru
    _
  // Predicated region
  $region14: #{qnetwork_forward.1} parent=0 // pred_check
    _
  $region15: #{qnetwork_forward.1} parent=0 // pred_check_branch
    %20 = sbr.rel (0) target = $region17
  $region16: #{qnetwork_forward.1} parent=0 // pred_region
    _
  $region17: #{qnetwork_forward.1} parent=0 // pred_fallthru
    _
  // Predicated region
  $region18: #{qnetwork_forward.1} parent=0 // pred_check
    _
  $region19: #{qnetwork_forward.1} parent=0 // pred_check_branch
    %22 = sbr.rel (0) target = $region21
  $region20: #{qnetwork_forward.1} parent=0 // pred_region
    _
  $region21: #{qnetwork_forward.1} parent=0 // pred_fallthru
    _
  // Predicated region
  $region22: #{qnetwork_forward.1} parent=0 // pred_check
    _
  $region23: #{qnetwork_forward.1} parent=0 // pred_check_branch
    %24 = sbr.rel (0) target = $region25
  $region24: #{qnetwork_forward.1} parent=0 // pred_region
    _
  $region25: #{qnetwork_forward.1} parent=0 // pred_fallthru
    _
  %v25 = vld [vmem:[%s0] sm:$0xff]
  %v26 = vld [vmem:[%s0 + $0x8] sm:$0xff]
  %v27 = vld [vmem:[%s0 + $0x10] sm:$0xff]
  %v28 = vld [vmem:[%s0 + $0x18] sm:$0xff]
  %v29 = vld [vmem:[%s0 + $0x20] sm:$0xff]
  %v30 = vld [vmem:[%s0 + $0x28] sm:$0xff]
  %v31 = vld [vmem:[%s0 + $0x30] sm:$0xff]
  %v32 = vld [vmem:[%s0 + $0x38] sm:$0xff]
  %v33 = vld [vmem:[%s0 + $0x40] sm:$0xff]
  %v34 = vld [vmem:[%s0 + $0x48] sm:$0xff]
  %v35 = vld [vmem:[%s0 + $0x50] sm:$0xff]
  %v36 = vld [vmem:[%s0 + $0x58] sm:$0xff]
  %v37 = vld [vmem:[%s0 + $0x60] sm:$0xff]
  %v38 = vld [vmem:[%s0 + $0x68] sm:$0xff]
  %v39 = vld [vmem:[%s0 + $0x70] sm:$0xff]
  %v40 = vld [vmem:[%s0 + $0x78] sm:$0xff]
  %v41 = vld [vmem:[%s1] sm:$0xff]
  %v42 = vld [vmem:[%s1 + $0x8] sm:$0xff]
  %v43 = vld [vmem:[%s1 + $0x10] sm:$0xff]
  %v44 = vld [vmem:[%s1 + $0x18] sm:$0xff]
  %v45 = vld [vmem:[%s3] sm:$0x3]
  %v46 = vld [vmem:[%s2] sm:$0x3]
  %v47 = vld [vmem:[%s4] sm:$0xff]
  %v48 = vld [vmem:[%s4 + $0x8] sm:$0xff]
  %v49 = vld [vmem:[%s5] sm:$0xff]
  %v50 = vld [vmem:[%s5 + $0x8] sm:$0xff]
  %v51 = vld [vmem:[%s5 + $0x10] sm:$0xff]
  %v52 = vld [vmem:[%s5 + $0x18] sm:$0xff]
  %54 = vset.pattern.permute.xlu0 0
  %55 = vperm.xlu0 %54, %v41
  %v56 = vpop.permute.xlu0 %55
  %59 = vset.pattern.permute.xlu0 0
  %60 = vperm.xlu0 %59, %v42
  %v61 = vpop.permute.xlu0 %60
  %64 = vset.pattern.permute.xlu0 0
  %65 = vperm.xlu0 %64, %v43
  %v66 = vpop.permute.xlu0 %65
  %69 = vset.pattern.permute.xlu0 0
  %70 = vperm.xlu0 %69, %v44
  %v71 = vpop.permute.xlu0 %70
  %v73 = vperm.slane %v45, 0
  %v74 = vmul.f32 %v56, %v73
  %v75 = vmul.f32 %v61, %v73
  %v76 = vmul.f32 %v66, %v73
  %v77 = vmul.f32 %v71, %v73
  %78 = vset.pattern.permute.xlu0 1
  %79 = vperm.xlu0 %78, %v41
  %v80 = vpop.permute.xlu0 %79
  %82 = vset.pattern.permute.xlu0 1
  %83 = vperm.xlu0 %82, %v42
  %v84 = vpop.permute.xlu0 %83
  %86 = vset.pattern.permute.xlu0 1
  %87 = vperm.xlu0 %86, %v43
  %v88 = vpop.permute.xlu0 %87
  %90 = vset.pattern.permute.xlu0 1
  %91 = vperm.xlu0 %90, %v44
  %v92 = vpop.permute.xlu0 %91
  %v94 = vperm.slane %v45, 1
  %v95 = vmul.f32 %v80, %v94
  %v96 = vmul.f32 %v84, %v94
  %v97 = vmul.f32 %v88, %v94
  %v98 = vmul.f32 %v92, %v94
  %vm99 = vcmask 261120
  %v101 = vsel %vm99, %v29, 0
  %v104 = vsel %vm99, %v30, 0
  %v107 = vsel %vm99, %v31, 0
  %v110 = vsel %vm99, %v32, 0
  %112 = vmatpush.msra.mxu0 0.0
  %113 = vmatpush.msra.mxu0 0.0
  %114 = vmatpush.msra.mxu0 0.0
  %115 = vmatpush.msra.mxu0 0.0
  %116 = vmatpush.msra.mxu0 0.0
  %117 = vmatpush.msra.mxu0 0.0
  %118 = vmatpush.msra.mxu0 0.0
  %119 = vmatpush.msra.mxu0 0.0
  %120 = vmatpush.msra.mxu0 0.0
  %121 = vmatpush.msra.mxu0 0.0
  %122 = vmatpush.msra.mxu0 0.0
  %123 = vmatpush.msra.mxu0 0.0
  %124 = vmatpush.msra.mxu0 %v98
  %125 = vmatpush.msra.mxu0 %v97
  %126 = vmatpush.msra.mxu0 %v96
  %127 = vmatpush.msra.mxu0 %v95
  %128 = vmatmul.f32.gmra.mxu0 %v101
  %v129 = vpop.f32.mrf.mxu0
  %v130 = vadd.f32 0.0, %v129
  %131 = vmatmul.f32.gmra.mxu0 %v104
  %v132 = vpop.f32.mrf.mxu0
  %v133 = vadd.f32 0.0, %v132
  %134 = vmatmul.f32.gmra.mxu0 %v107
  %v135 = vpop.f32.mrf.mxu0
  %v136 = vadd.f32 0.0, %v135
  %137 = vmatmul.f32.gmra.mxu0 %v110
  %v138 = vpop.f32.mrf.mxu0
  %v139 = vadd.f32 0.0, %v138
  %140 = vdwg.mxu0
  %v141 = vadd.f32 %v74, %v130
  %v142 = vadd.f32 %v75, %v133
  %v143 = vadd.f32 %v76, %v136
  %v144 = vadd.f32 %v77, %v139
  %vm145 = vcmask 130048
  %v147 = vsel %vm145, %v49, 0
  %v150 = vsel %vm145, %v50, 0
  %v153 = vsel %vm145, %v51, 0
  %v156 = vsel %vm145, %v52, 0
  %158 = vmatpush.msra.mxu0 0.0
  %159 = vmatpush.msra.mxu0 0.0
  %160 = vmatpush.msra.mxu0 0.0
  %161 = vmatpush.msra.mxu0 0.0
  %162 = vmatpush.msra.mxu0 0.0
  %163 = vmatpush.msra.mxu0 0.0
  %164 = vmatpush.msra.mxu0 0.0
  %165 = vmatpush.msra.mxu0 0.0
  %166 = vmatpush.msra.mxu0 0.0
  %167 = vmatpush.msra.mxu0 0.0
  %168 = vmatpush.msra.mxu0 0.0
  %169 = vmatpush.msra.mxu0 0.0
  %170 = vmatpush.msra.mxu0 0.0
  %171 = vmatpush.msra.mxu0 0.0
  %172 = vmatpush.msra.mxu0 %v48
  %173 = vmatpush.msra.mxu0 %v47
  %174 = vmatmul.f32.gmra.mxu0 %v147
  %v175 = vpop.f32.mrf.mxu0
  %v176 = vadd.f32 0.0, %v175
  %177 = vmatmul.f32.gmra.mxu0 %v150
  %v178 = vpop.f32.mrf.mxu0
  %v179 = vadd.f32 0.0, %v178
  %180 = vmatmul.f32.gmra.mxu0 %v153
  %v181 = vpop.f32.mrf.mxu0
  %v182 = vadd.f32 0.0, %v181
  %183 = vmatmul.f32.gmra.mxu0 %v156
  %v184 = vpop.f32.mrf.mxu0
  %v185 = vadd.f32 0.0, %v184
  %186 = vdwg.mxu0
  %v188 = vsel %vm99, %v25, 0
  %v191 = vsel %vm99, %v26, 0
  %v194 = vsel %vm99, %v27, 0
  %v197 = vsel %vm99, %v28, 0
  %199 = vmatpush.msra.mxu0 0.0
  %200 = vmatpush.msra.mxu0 0.0
  %201 = vmatpush.msra.mxu0 0.0
  %202 = vmatpush.msra.mxu0 0.0
  %203 = vmatpush.msra.mxu0 0.0
  %204 = vmatpush.msra.mxu0 0.0
  %205 = vmatpush.msra.mxu0 0.0
  %206 = vmatpush.msra.mxu0 0.0
  %207 = vmatpush.msra.mxu0 0.0
  %208 = vmatpush.msra.mxu0 0.0
  %209 = vmatpush.msra.mxu0 0.0
  %210 = vmatpush.msra.mxu0 0.0
  %211 = vmatpush.msra.mxu0 %v185
  %212 = vmatpush.msra.mxu0 %v182
  %213 = vmatpush.msra.mxu0 %v179
  %214 = vmatpush.msra.mxu0 %v176
  %215 = vmatmul.f32.gmra.mxu0 %v188
  %v216 = vpop.f32.mrf.mxu0
  %v217 = vadd.f32 0.0, %v216
  %218 = vmatmul.f32.gmra.mxu0 %v191
  %v219 = vpop.f32.mrf.mxu0
  %v220 = vadd.f32 0.0, %v219
  %221 = vmatmul.f32.gmra.mxu0 %v194
  %v222 = vpop.f32.mrf.mxu0
  %v223 = vadd.f32 0.0, %v222
  %224 = vmatmul.f32.gmra.mxu0 %v197
  %v225 = vpop.f32.mrf.mxu0
  %v226 = vadd.f32 0.0, %v225
  %227 = vdwg.mxu0
  %v228 = vadd.f32 %v141, %v217
  %v229 = vadd.f32 %v142, %v220
  %v230 = vadd.f32 %v143, %v223
  %v231 = vadd.f32 %v144, %v226
  %v233 = vsel %vm145, %v228, 0
  %v236 = vsel %vm145, %v229, 0
  %v239 = vsel %vm145, %v230, 0
  %v242 = vsel %vm145, %v231, 0
  %244 = vmatpush.msra.mxu0 0.0
  %245 = vmatpush.msra.mxu0 0.0
  %246 = vmatpush.msra.mxu0 0.0
  %247 = vmatpush.msra.mxu0 0.0
  %248 = vmatpush.msra.mxu0 0.0
  %249 = vmatpush.msra.mxu0 0.0
  %250 = vmatpush.msra.mxu0 0.0
  %251 = vmatpush.msra.mxu0 0.0
  %252 = vmatpush.msra.mxu0 0.0
  %253 = vmatpush.msra.mxu0 0.0
  %254 = vmatpush.msra.mxu0 0.0
  %255 = vmatpush.msra.mxu0 0.0
  %256 = vmatpush.msra.mxu0 0.0
  %257 = vmatpush.msra.mxu0 0.0
  %258 = vmatpush.msra.mxu0 %v48
  %259 = vmatpush.msra.mxu0 %v47
  %260 = vmatmul.f32.gmra.mxu0 %v233
  %v261 = vpop.f32.mrf.mxu0
  %v262 = vadd.f32 0.0, %v261
  %263 = vmatmul.f32.gmra.mxu0 %v236
  %v264 = vpop.f32.mrf.mxu0
  %v265 = vadd.f32 0.0, %v264
  %266 = vmatmul.f32.gmra.mxu0 %v239
  %v267 = vpop.f32.mrf.mxu0
  %v268 = vadd.f32 0.0, %v267
  %269 = vmatmul.f32.gmra.mxu0 %v242
  %v270 = vpop.f32.mrf.mxu0
  %v271 = vadd.f32 0.0, %v270
  %272 = vdwg.mxu0
  %273 = vmatpush.msra.mxu0 0.0
  %274 = vmatpush.msra.mxu0 0.0
  %275 = vmatpush.msra.mxu0 0.0
  %276 = vmatpush.msra.mxu0 0.0
  %277 = vmatpush.msra.mxu0 0.0
  %278 = vmatpush.msra.mxu0 0.0
  %279 = vmatpush.msra.mxu0 0.0
  %280 = vmatpush.msra.mxu0 0.0
  %281 = vmatpush.msra.mxu0 0.0
  %282 = vmatpush.msra.mxu0 0.0
  %283 = vmatpush.msra.mxu0 0.0
  %284 = vmatpush.msra.mxu0 0.0
  %285 = vmatpush.msra.mxu0 %v271
  %286 = vmatpush.msra.mxu0 %v268
  %287 = vmatpush.msra.mxu0 %v265
  %288 = vmatpush.msra.mxu0 %v262
  %289 = vmatmul.f32.gmra.mxu0 %v188
  %v290 = vpop.f32.mrf.mxu0
  %v291 = vadd.f32 0.0, %v290
  %292 = vmatmul.f32.gmra.mxu0 %v191
  %v293 = vpop.f32.mrf.mxu0
  %v294 = vadd.f32 0.0, %v293
  %295 = vmatmul.f32.gmra.mxu0 %v194
  %v296 = vpop.f32.mrf.mxu0
  %v297 = vadd.f32 0.0, %v296
  %298 = vmatmul.f32.gmra.mxu0 %v197
  %v299 = vpop.f32.mrf.mxu0
  %v300 = vadd.f32 0.0, %v299
  %301 = vdwg.mxu0
  %v302 = vadd.f32 %v141, %v291
  %v303 = vadd.f32 %v142, %v294
  %v304 = vadd.f32 %v143, %v297
  %v305 = vadd.f32 %v144, %v300
  %v307 = vsel %vm145, %v302, 0
  %v310 = vsel %vm145, %v303, 0
  %v313 = vsel %vm145, %v304, 0
  %v316 = vsel %vm145, %v305, 0
  %318 = vmatpush.msra.mxu0 0.0
  %319 = vmatpush.msra.mxu0 0.0
  %320 = vmatpush.msra.mxu0 0.0
  %321 = vmatpush.msra.mxu0 0.0
  %322 = vmatpush.msra.mxu0 0.0
  %323 = vmatpush.msra.mxu0 0.0
  %324 = vmatpush.msra.mxu0 0.0
  %325 = vmatpush.msra.mxu0 0.0
  %326 = vmatpush.msra.mxu0 0.0
  %327 = vmatpush.msra.mxu0 0.0
  %328 = vmatpush.msra.mxu0 0.0
  %329 = vmatpush.msra.mxu0 0.0
  %330 = vmatpush.msra.mxu0 0.0
  %331 = vmatpush.msra.mxu0 0.0
  %332 = vmatpush.msra.mxu0 %v48
  %333 = vmatpush.msra.mxu0 %v47
  %334 = vmatmul.f32.gmra.mxu0 %v307
  %v335 = vpop.f32.mrf.mxu0
  %v336 = vadd.f32 0.0, %v335
  %337 = vmatmul.f32.gmra.mxu0 %v310
  %v338 = vpop.f32.mrf.mxu0
  %v339 = vadd.f32 0.0, %v338
  %340 = vmatmul.f32.gmra.mxu0 %v313
  %v341 = vpop.f32.mrf.mxu0
  %v342 = vadd.f32 0.0, %v341
  %343 = vmatmul.f32.gmra.mxu0 %v316
  %v344 = vpop.f32.mrf.mxu0
  %v345 = vadd.f32 0.0, %v344
  %346 = vdwg.mxu0
  %347 = vmatpush.msra.mxu0 0.0
  %348 = vmatpush.msra.mxu0 0.0
  %349 = vmatpush.msra.mxu0 0.0
  %350 = vmatpush.msra.mxu0 0.0
  %351 = vmatpush.msra.mxu0 0.0
  %352 = vmatpush.msra.mxu0 0.0
  %353 = vmatpush.msra.mxu0 0.0
  %354 = vmatpush.msra.mxu0 0.0
  %355 = vmatpush.msra.mxu0 0.0
  %356 = vmatpush.msra.mxu0 0.0
  %357 = vmatpush.msra.mxu0 0.0
  %358 = vmatpush.msra.mxu0 0.0
  %359 = vmatpush.msra.mxu0 %v345
  %360 = vmatpush.msra.mxu0 %v342
  %361 = vmatpush.msra.mxu0 %v339
  %362 = vmatpush.msra.mxu0 %v336
  %363 = vmatmul.f32.gmra.mxu0 %v188
  %v364 = vpop.f32.mrf.mxu0
  %v365 = vadd.f32 0.0, %v364
  %366 = vmatmul.f32.gmra.mxu0 %v191
  %v367 = vpop.f32.mrf.mxu0
  %v368 = vadd.f32 0.0, %v367
  %369 = vmatmul.f32.gmra.mxu0 %v194
  %v370 = vpop.f32.mrf.mxu0
  %v371 = vadd.f32 0.0, %v370
  %372 = vmatmul.f32.gmra.mxu0 %v197
  %v373 = vpop.f32.mrf.mxu0
  %v374 = vadd.f32 0.0, %v373
  %375 = vdwg.mxu0
  %v376 = vadd.f32 %v141, %v365
  %v377 = vadd.f32 %v142, %v368
  %v378 = vadd.f32 %v143, %v371
  %v379 = vadd.f32 %v144, %v374
  %v381 = vsel %vm145, %v376, 0
  %v384 = vsel %vm145, %v377, 0
  %v387 = vsel %vm145, %v378, 0
  %v390 = vsel %vm145, %v379, 0
  %392 = vmatpush.msra.mxu0 0.0
  %393 = vmatpush.msra.mxu0 0.0
  %394 = vmatpush.msra.mxu0 0.0
  %395 = vmatpush.msra.mxu0 0.0
  %396 = vmatpush.msra.mxu0 0.0
  %397 = vmatpush.msra.mxu0 0.0
  %398 = vmatpush.msra.mxu0 0.0
  %399 = vmatpush.msra.mxu0 0.0
  %400 = vmatpush.msra.mxu0 0.0
  %401 = vmatpush.msra.mxu0 0.0
  %402 = vmatpush.msra.mxu0 0.0
  %403 = vmatpush.msra.mxu0 0.0
  %404 = vmatpush.msra.mxu0 0.0
  %405 = vmatpush.msra.mxu0 0.0
  %406 = vmatpush.msra.mxu0 %v48
  %407 = vmatpush.msra.mxu0 %v47
  %408 = vmatmul.f32.gmra.mxu0 %v381
  %v409 = vpop.f32.mrf.mxu0
  %v410 = vadd.f32 0.0, %v409
  %411 = vmatmul.f32.gmra.mxu0 %v384
  %v412 = vpop.f32.mrf.mxu0
  %v413 = vadd.f32 0.0, %v412
  %414 = vmatmul.f32.gmra.mxu0 %v387
  %v415 = vpop.f32.mrf.mxu0
  %v416 = vadd.f32 0.0, %v415
  %417 = vmatmul.f32.gmra.mxu0 %v390
  %v418 = vpop.f32.mrf.mxu0
  %v419 = vadd.f32 0.0, %v418
  %420 = vdwg.mxu0
  %421 = vmatpush.msra.mxu0 0.0
  %422 = vmatpush.msra.mxu0 0.0
  %423 = vmatpush.msra.mxu0 0.0
  %424 = vmatpush.msra.mxu0 0.0
  %425 = vmatpush.msra.mxu0 0.0
  %426 = vmatpush.msra.mxu0 0.0
  %427 = vmatpush.msra.mxu0 0.0
  %428 = vmatpush.msra.mxu0 0.0
  %429 = vmatpush.msra.mxu0 0.0
  %430 = vmatpush.msra.mxu0 0.0
  %431 = vmatpush.msra.mxu0 0.0
  %432 = vmatpush.msra.mxu0 0.0
  %433 = vmatpush.msra.mxu0 %v419
  %434 = vmatpush.msra.mxu0 %v416
  %435 = vmatpush.msra.mxu0 %v413
  %436 = vmatpush.msra.mxu0 %v410
  %437 = vmatmul.f32.gmra.mxu0 %v188
  %v438 = vpop.f32.mrf.mxu0
  %v439 = vadd.f32 0.0, %v438
  %440 = vmatmul.f32.gmra.mxu0 %v191
  %v441 = vpop.f32.mrf.mxu0
  %v442 = vadd.f32 0.0, %v441
  %443 = vmatmul.f32.gmra.mxu0 %v194
  %v444 = vpop.f32.mrf.mxu0
  %v445 = vadd.f32 0.0, %v444
  %446 = vmatmul.f32.gmra.mxu0 %v197
  %v447 = vpop.f32.mrf.mxu0
  %v448 = vadd.f32 0.0, %v447
  %449 = vdwg.mxu0
  %v450 = vadd.f32 %v141, %v439
  %v451 = vadd.f32 %v142, %v442
  %v452 = vadd.f32 %v143, %v445
  %v453 = vadd.f32 %v144, %v448
  %v454 = vsub.f32 %v376, %v450
  %v455 = vsub.f32 %v377, %v451
  %v456 = vsub.f32 %v378, %v452
  %v457 = vsub.f32 %v379, %v453
  %458 = vst.msk [vmem:[%s6] sm:$0xff] %vm145, %v450
  %459 = vst.msk [vmem:[%s6 + $0x8] sm:$0xff] %vm145, %v451
  %460 = vst.msk [vmem:[%s6 + $0x10] sm:$0xff] %vm145, %v452
  %461 = vst.msk [vmem:[%s6 + $0x18] sm:$0xff] %vm145, %v453
  %462 = vst.msk [vmem:[%s6 + $0x20] sm:$0xff] %vm145, %v454
  %463 = vst.msk [vmem:[%s6 + $0x28] sm:$0xff] %vm145, %v455
  %464 = vst.msk [vmem:[%s6 + $0x30] sm:$0xff] %vm145, %v456
  %465 = vst.msk [vmem:[%s6 + $0x38] sm:$0xff] %vm145, %v457
  %v466 = vsel %vm145, %v450, 0.0
  %467 = vadd.xlane.f32.xlu0 %v466
  %v468 = vpop.xlane.xlu0 %467
  %v469 = vsel %vm145, %v451, 0.0
  %470 = vadd.xlane.f32.xlu0 %v469
  %v471 = vpop.xlane.xlu0 %470
  %v472 = vsel %vm145, %v452, 0.0
  %473 = vadd.xlane.f32.xlu0 %v472
  %v474 = vpop.xlane.xlu0 %473
  %v475 = vsel %vm145, %v453, 0.0
  %476 = vadd.xlane.f32.xlu0 %v475
  %v477 = vpop.xlane.xlu0 %476
  %v479 = vsel %vm99, %v33, 0
  %v482 = vsel %vm99, %v34, 0
  %v485 = vsel %vm99, %v35, 0
  %v488 = vsel %vm99, %v36, 0
  %490 = vmatpush.msra.mxu0 0.0
  %491 = vmatpush.msra.mxu0 0.0
  %492 = vmatpush.msra.mxu0 0.0
  %493 = vmatpush.msra.mxu0 0.0
  %494 = vmatpush.msra.mxu0 0.0
  %495 = vmatpush.msra.mxu0 0.0
  %496 = vmatpush.msra.mxu0 0.0
  %497 = vmatpush.msra.mxu0 0.0
  %498 = vmatpush.msra.mxu0 0.0
  %499 = vmatpush.msra.mxu0 0.0
  %500 = vmatpush.msra.mxu0 0.0
  %501 = vmatpush.msra.mxu0 0.0
  %502 = vmatpush.msra.mxu0 %v477
  %503 = vmatpush.msra.mxu0 %v474
  %504 = vmatpush.msra.mxu0 %v471
  %505 = vmatpush.msra.mxu0 %v468
  %506 = vmatmul.f32.gmra.mxu0 %v479
  %v507 = vpop.f32.mrf.mxu0
  %v508 = vadd.f32 0.0, %v507
  %509 = vmatmul.f32.gmra.mxu0 %v482
  %v510 = vpop.f32.mrf.mxu0
  %v511 = vadd.f32 0.0, %v510
  %512 = vmatmul.f32.gmra.mxu0 %v485
  %v513 = vpop.f32.mrf.mxu0
  %v514 = vadd.f32 0.0, %v513
  %515 = vmatmul.f32.gmra.mxu0 %v488
  %v516 = vpop.f32.mrf.mxu0
  %v517 = vadd.f32 0.0, %v516
  %518 = vdwg.mxu0
  %v519 = vmax.f32 %v508, 0.0
  %v520 = vmax.f32 %v511, 0.0
  %v521 = vmax.f32 %v514, 0.0
  %v522 = vmax.f32 %v517, 0.0
  %v524 = vsel %vm99, %v46, 0
  %526 = vmatpush.msra.mxu0 0.0
  %527 = vmatpush.msra.mxu0 0.0
  %528 = vmatpush.msra.mxu0 0.0
  %529 = vmatpush.msra.mxu0 0.0
  %530 = vmatpush.msra.mxu0 0.0
  %531 = vmatpush.msra.mxu0 0.0
  %532 = vmatpush.msra.mxu0 0.0
  %533 = vmatpush.msra.mxu0 0.0
  %534 = vmatpush.msra.mxu0 0.0
  %535 = vmatpush.msra.mxu0 0.0
  %536 = vmatpush.msra.mxu0 0.0
  %537 = vmatpush.msra.mxu0 0.0
  %538 = vmatpush.msra.mxu0 %v522
  %539 = vmatpush.msra.mxu0 %v521
  %540 = vmatpush.msra.mxu0 %v520
  %541 = vmatpush.msra.mxu0 %v519
  %542 = vmatmul.f32.gmra.mxu0 %v524
  %v543 = vpop.f32.mrf.mxu0
  %v544 = vadd.f32 0.0, %v543
  %545 = vdwg.mxu0
  %v547 = vsel %vm99, %v37, 0
  %v550 = vsel %vm99, %v38, 0
  %v553 = vsel %vm99, %v39, 0
  %v556 = vsel %vm99, %v40, 0
  %558 = vmatpush.msra.mxu0 0.0
  %559 = vmatpush.msra.mxu0 0.0
  %560 = vmatpush.msra.mxu0 0.0
  %561 = vmatpush.msra.mxu0 0.0
  %562 = vmatpush.msra.mxu0 0.0
  %563 = vmatpush.msra.mxu0 0.0
  %564 = vmatpush.msra.mxu0 0.0
  %565 = vmatpush.msra.mxu0 0.0
  %566 = vmatpush.msra.mxu0 0.0
  %567 = vmatpush.msra.mxu0 0.0
  %568 = vmatpush.msra.mxu0 0.0
  %569 = vmatpush.msra.mxu0 0.0
  %570 = vmatpush.msra.mxu0 %v453
  %571 = vmatpush.msra.mxu0 %v452
  %572 = vmatpush.msra.mxu0 %v451
  %573 = vmatpush.msra.mxu0 %v450
  %574 = vmatmul.f32.gmra.mxu0 %v547
  %v575 = vpop.f32.mrf.mxu0
  %v576 = vadd.f32 0.0, %v575
  %577 = vmatmul.f32.gmra.mxu0 %v550
  %v578 = vpop.f32.mrf.mxu0
  %v579 = vadd.f32 0.0, %v578
  %580 = vmatmul.f32.gmra.mxu0 %v553
  %v581 = vpop.f32.mrf.mxu0
  %v582 = vadd.f32 0.0, %v581
  %583 = vmatmul.f32.gmra.mxu0 %v556
  %v584 = vpop.f32.mrf.mxu0
  %v585 = vadd.f32 0.0, %v584
  %586 = vdwg.mxu0
  %v587 = vmax.f32 %v576, 0.0
  %v588 = vmax.f32 %v579, 0.0
  %v589 = vmax.f32 %v582, 0.0
  %v590 = vmax.f32 %v585, 0.0
  %591 = vrot.lane.b32.xlu0 %v46, 96
  %v592 = vpop.permute.xlu0 %591
  %v593 = vsel %vm99, %v592, 0
  %595 = vmatpush.msra.mxu0 0.0
  %596 = vmatpush.msra.mxu0 0.0
  %597 = vmatpush.msra.mxu0 0.0
  %598 = vmatpush.msra.mxu0 0.0
  %599 = vmatpush.msra.mxu0 0.0
  %600 = vmatpush.msra.mxu0 0.0
  %601 = vmatpush.msra.mxu0 0.0
  %602 = vmatpush.msra.mxu0 0.0
  %603 = vmatpush.msra.mxu0 0.0
  %604 = vmatpush.msra.mxu0 0.0
  %605 = vmatpush.msra.mxu0 0.0
  %606 = vmatpush.msra.mxu0 0.0
  %607 = vmatpush.msra.mxu0 %v590
  %608 = vmatpush.msra.mxu0 %v589
  %609 = vmatpush.msra.mxu0 %v588
  %610 = vmatpush.msra.mxu0 %v587
  %611 = vmatmul.f32.gmra.mxu0 %v593
  %v612 = vpop.f32.mrf.mxu0
  %v613 = vadd.f32 0.0, %v612
  %614 = vdwg.mxu0
  %616 = vset.pattern.permute.xlu0 0
  %617 = vperm.xlu0 %616, %v544
  %v618 = vpop.permute.xlu0 %617
  %v620 = vadd.f32 %v618, %v613
  %vm621 = vcmask 123904
  %622 = vst.msk [vmem:[%s7] sm:$0x3] %vm621, %v620
  // Predicated region
  $region26: #{qnetwork_forward.1} parent=0 // pred_check
    _
  $region27: #{qnetwork_forward.1} parent=0 // pred_check_branch
    %624 = sbr.rel (0) target = $region29
  $region28: #{qnetwork_forward.1} parent=0 // pred_region
    _
  $region29: #{qnetwork_forward.1} parent=0 // pred_fallthru
    _
  // Predicated region
  $region30: #{qnetwork_forward.1} parent=0 // pred_check
    _
  $region31: #{qnetwork_forward.1} parent=0 // pred_check_branch
    %626 = sbr.rel (0) target = $region33
  $region32: #{qnetwork_forward.1} parent=0 // pred_region
    _
  $region33: #{qnetwork_forward.1} parent=0 // pred_fallthru
    _
  // Predicated region
  $region34: #{qnetwork_forward.1} parent=0 // pred_check
    _
  $region35: #{qnetwork_forward.1} parent=0 // pred_check_branch
    %628 = sbr.rel (0) target = $region37
  $region36: #{qnetwork_forward.1} parent=0 // pred_region
    _
  $region37: #{qnetwork_forward.1} parent=0 // pred_fallthru
    _
  // Predicated region
  $region38: #{qnetwork_forward.1} parent=0 // pred_check
    _
  $region39: #{qnetwork_forward.1} parent=0 // pred_check_branch
    %630 = sbr.rel (0) target = $region41
  $region40: #{qnetwork_forward.1} parent=0 // pred_region
    _
  $region41: #{qnetwork_forward.1} parent=0 // pred_fallthru
    _

</llo_original>
